<compile_context>
chip_gen: v5e
topology: v5e:2x2
jax: 0.10.0
libtpu: 0.0.40
codegen_flags: <defaults>
</compile_context>

<pallas_src>
import jax
import jax.numpy as jnp
from jax import lax
from jax.experimental import pallas as pl
from jax.experimental.pallas import tpu as pltpu


def _make_kernel(steps_per_core: int, valid_rows: int):
    """Build the per-step kernel with static loop-split / row-bound constants."""

    def kernel(pred_ref, tgt_ref, cls_ref, wln_ref, exp_ref, num_ref, den_ref):
        # pred_ref : (R, L)  f32/bf16 log-probs, lane-dense flat view
        # tgt_ref  : (R, G)  i32 class ids (G points per flat row)
        # cls_ref  : (1, L)  f32 class id of each lane (lane % C_pad)
        # wln_ref  : (1, L)  f32 class weight of each lane (0 for padded classes)
        # exp_ref  : (G, L)  f32 expander: E[j, l] = 1 iff lane l belongs to point j
        # num_ref  : (8, L)  f32 per-core numerator accumulator   (output block)
        # den_ref  : (8, L)  f32 per-core denominator accumulator (output block)
        j = pl.program_id(1)

        @pl.when(j == 0)
        def _init():
            num_ref[...] = jnp.zeros_like(num_ref)
            den_ref[...] = jnp.zeros_like(den_ref)

        pred = pred_ref[...].astype(jnp.float32)          # (R, L), bf16 -> f32 upcast
        r, l = pred.shape

        # Expand each point's target id onto its class lanes via a tiny MXU matmul.
        texp = jnp.dot(tgt_ref[...].astype(jnp.float32), exp_ref[...],
                       preferred_element_type=jnp.float32)            # (R, L)

        # Global row validity: guards the partial last tile and phantom tiles of the
        # 2-core split (those rows may contain unspecified data, possibly NaN).
        t_id = pl.program_id(0) * steps_per_core + j
        rowid = t_id * r + lax.broadcasted_iota(jnp.int32, (r, 1), 0)  # (R, 1)
        valid = rowid < valid_rows

        hit = (texp == cls_ref[...]) & valid                            # (R, L)
        wm = jnp.where(hit, wln_ref[...], 0.0)                          # w[t_i] at hit lanes
        nm = jnp.where(hit, wln_ref[...] * pred, 0.0)                   # w[t_i] * logp[i, t_i]

        # Pure-VPU accumulation: fold rows into the (8, L) output accumulator.
        k = r // 8
        num_ref[...] += jnp.sum(nm.reshape(k, 8, l), axis=0)
        den_ref[...] += jnp.sum(wm.reshape(k, 8, l), axis=0)

    return kernel


def nll_loss_pallas(pred, target, trans_feat, weight, *, tile_rows=4096):
    """Equivalent of get_loss().forward(pred, target, trans_feat, weight)."""
    del trans_feat  # unused by the reference forward
    n, c = pred.shape

    # ---- lane-dense flat view of pred --------------------------------------------------
    if c <= 128:
        c_pad = int(pl.next_power_of_2(c))      # divides 128
        lanes = 128
    else:
        c_pad = int(pl.cdiv(c, 128)) * 128
        lanes = c_pad
    g = lanes // c_pad                          # points per flat row

    n_pad = max(int(pl.cdiv(n, g)) * g, 8 * g)  # rows must be >= 8 and n a multiple of g
    rows = n_pad // g

    tgt = target.astype(jnp.int32)
    if c_pad == c and n_pad == n:
        # Free view: contiguous reshape, no transpose, no pad, no extra HBM pass.
        pred_flat = pred.reshape(rows, lanes)
    else:
        # TODO(synk): emit pred already padded to (n_pad, c_pad) upstream to drop this pass.
        pred_flat = jnp.pad(pred, ((0, n_pad - n), (0, c_pad - c))).reshape(rows, lanes)
    if n_pad != n:
        tgt = jnp.pad(tgt, (0, n_pad - n), constant_values=-1)  # -1 matches no class
    tgt2 = tgt.reshape(rows, g)

    # ---- tiny constant per-lane metadata (negligible wrapper cost) ---------------------
    w32 = weight.astype(jnp.float32)
    lane = jnp.arange(lanes, dtype=jnp.int32)
    cls_of_lane = lane % c_pad
    w_padded = jnp.pad(w32, (0, c_pad - c))                     # padded classes get weight 0
    wlane = w_padded[cls_of_lane][None, :]                      # (1, lanes)
    cls_row = cls_of_lane.astype(jnp.float32)[None, :]          # (1, lanes)
    expand = (lane[None, :] // c_pad ==
              jnp.arange(g, dtype=jnp.int32)[:, None]).astype(jnp.float32)   # (g, lanes)

    # ---- tiling + 2-TensorCore split ----------------------------------------------------
    tile_rows = max(8, (tile_rows // 8) * 8)
    tile_r = min(tile_rows, (rows // 8) * 8)    # always a multiple of 8, <= rows
    num_tiles = int(pl.cdiv(rows, tile_r))
    n_cores = 2 if num_tiles >= 2 else 1
    steps = int(pl.cdiv(num_tiles, n_cores))

    def data_map(i, j):
        # Clamp phantom tiles (odd split) to a valid block; the in-kernel row mask zeroes them.
        return (jnp.minimum(i * steps + j, num_tiles - 1), 0)

    kernel = _make_kernel(steps, rows)

    num_out, den_out = pl.pallas_call(
        kernel,
        out_shape=(jax.ShapeDtypeStruct((n_cores * 8, lanes), jnp.float32),
                   jax.ShapeDtypeStruct((n_cores * 8, lanes), jnp.float32)),
        grid_spec=pltpu.PrefetchScalarGridSpec(
            num_scalar_prefetch=0,
            grid=(n_cores, steps),
            in_specs=[
                pl.BlockSpec((tile_r, lanes), data_map),          # pred, lane-dense flat
                pl.BlockSpec((tile_r, g), data_map),              # targets, flat rows
                pl.BlockSpec((1, lanes), lambda i, j: (0, 0)),    # class id per lane (resident)
                pl.BlockSpec((1, lanes), lambda i, j: (0, 0)),    # weight per lane (resident)
                pl.BlockSpec((g, lanes), lambda i, j: (0, 0)),    # target->lane expander
            ],
            out_specs=[
                pl.BlockSpec((8, lanes), lambda i, j: (i, 0)),    # per-core numerator acc
                pl.BlockSpec((8, lanes), lambda i, j: (i, 0)),    # per-core denominator acc
            ],
        ),
        compiler_params=pltpu.CompilerParams(
            dimension_semantics=("parallel", "arbitrary"),        # cores x row-tiles
            vmem_limit_bytes=32 * 1024 * 1024,                    # v7x-safe budget
        ),
    )(pred_flat, tgt2, cls_row, wlane, expand)

    total_num = jnp.sum(num_out)
    total_den = jnp.sum(den_out)
    return (-total_num / total_den).astype(pred.dtype)


if __name__ == "__main__":
    key = jax.random.PRNGKey(0)
    k_logits, k_target, k_weight, k_feat = jax.random.split(key, 4)

    # Small segmentation-style shapes: batch=2, points=64 -> N = 128, C = 8 classes.
    B, P, C = 2, 64, 8
    N = B * P

    logits = jax.random.normal(k_logits, (N, C), dtype=jnp.float32)
    pred = jax.nn.log_softmax(logits, axis=-1)          # log-probs, as nll_loss expects
    target = jax.random.randint(k_target, (N,), 0, C, dtype=jnp.int32)
    weight = jax.random.uniform(k_weight, (C,), dtype=jnp.float32, minval=0.5, maxval=1.5)
    trans_feat = jax.random.normal(k_feat, (B, 64, 64), dtype=jnp.float32)  # unused, sig parity

    loss = jax.jit(nll_loss_pallas)(pred, target, trans_feat, weight)
    jax.block_until_ready(loss)

    # Pure-JAX reference: weighted-mean NLL loss.
    one_hot = jax.nn.one_hot(target, C, dtype=pred.dtype)
    picked = jnp.sum(pred * one_hot, axis=-1)
    w_per = weight[target]
    ref = -jnp.sum(w_per * picked) / jnp.sum(w_per)
    assert jnp.allclose(loss, ref, atol=1e-5, rtol=1e-5), (loss, ref)

    # Second config exercising the padded-class path (C=13 classes, S3DIS-like).
    C2 = 13
    logits2 = jax.random.normal(k_logits, (N, C2), dtype=jnp.float32)
    pred2 = jax.nn.log_softmax(logits2, axis=-1)
    target2 = jax.random.randint(k_target, (N,), 0, C2, dtype=jnp.int32)
    weight2 = jax.random.uniform(k_weight, (C2,), dtype=jnp.float32, minval=0.5, maxval=1.5)
    loss2 = jax.jit(nll_loss_pallas)(pred2, target2, trans_feat, weight2)
    jax.block_until_ready(loss2)
    one_hot2 = jax.nn.one_hot(target2, C2, dtype=pred2.dtype)
    w_per2 = weight2[target2]
    ref2 = -jnp.sum(w_per2 * jnp.sum(pred2 * one_hot2, axis=-1)) / jnp.sum(w_per2)
    assert jnp.allclose(loss2, ref2, atol=1e-5, rtol=1e-5), (loss2, ref2)

    print("KERNEL_OK")
</pallas_src>

<mosaic_0001>
module attributes {stable_mosaic.version = 11 : i64} {
  func.func @kernel(%arg0: i32, %arg1: i32, %arg2: memref<8x128xf32, #tpu.memory_space<vmem>>, %arg3: memref<8x16xi32, #tpu.memory_space<vmem>>, %arg4: memref<1x128xf32, #tpu.memory_space<vmem>>, %arg5: memref<1x128xf32, #tpu.memory_space<vmem>>, %arg6: memref<16x128xf32, #tpu.memory_space<vmem>>, %arg7: memref<8x128xf32, #tpu.memory_space<vmem>>, %arg8: memref<8x128xf32, #tpu.memory_space<vmem>>) attributes {dimension_semantics = [#tpu.dimension_semantics<parallel>, #tpu.dimension_semantics<arbitrary>], iteration_bounds = array<i64: 1, 1>, scalar_prefetch = 0 : i64, scratch_operands = 0 : i64, tpu.core_type = #tpu.core_type<tc>, window_params = [{transform_indices = @transform_0, window_bounds = array<i64: 8, 128>}, {transform_indices = @transform_1, window_bounds = array<i64: 8, 16>}, {pipeline_mode = #tpu.pipeline_mode<synchronous>, transform_indices = @transform_2, window_bounds = array<i64: 1, 128>}, {pipeline_mode = #tpu.pipeline_mode<synchronous>, transform_indices = @transform_3, window_bounds = array<i64: 1, 128>}, {pipeline_mode = #tpu.pipeline_mode<synchronous>, transform_indices = @transform_4, window_bounds = array<i64: 16, 128>}, {transform_indices = @transform_5, window_bounds = array<i64: 8, 128>}, {transform_indices = @transform_6, window_bounds = array<i64: 8, 128>}]} {
    %c0_i32 = arith.constant 0 : i32
    %0 = arith.cmpi eq, %arg1, %c0_i32 : i32
    %1 = arith.extui %0 : i1 to i32
    %c0_i32_0 = arith.constant 0 : i32
    %2 = arith.cmpi ne, %1, %c0_i32_0 : i32
    scf.if %2 {
      %cst_25 = arith.constant 0.000000e+00 : f32
      %41 = vector.broadcast %cst_25 : f32 to vector<8x128xf32>
      %c0_26 = arith.constant 0 : index
      %c0_27 = arith.constant 0 : index
      %42 = vector.load %arg7[%c0_26, %c0_27] : memref<8x128xf32, #tpu.memory_space<vmem>>, vector<8x128xf32>
      tpu.vector_store %arg7[%c0_26, %c0_27], %41 {strides = array<i32>} : memref<8x128xf32, #tpu.memory_space<vmem>>, vector<8x128xf32>,
      %cst_28 = arith.constant 0.000000e+00 : f32
      %43 = vector.broadcast %cst_28 : f32 to vector<8x128xf32>
      %c0_29 = arith.constant 0 : index
      %c0_30 = arith.constant 0 : index
      %44 = vector.load %arg8[%c0_29, %c0_30] : memref<8x128xf32, #tpu.memory_space<vmem>>, vector<8x128xf32>
      tpu.vector_store %arg8[%c0_29, %c0_30], %43 {strides = array<i32>} : memref<8x128xf32, #tpu.memory_space<vmem>>, vector<8x128xf32>,
    } else {
    }
    %c0 = arith.constant 0 : index
    %c0_1 = arith.constant 0 : index
    %3 = vector.load %arg2[%c0, %c0_1] : memref<8x128xf32, #tpu.memory_space<vmem>>, vector<8x128xf32>
    %c0_2 = arith.constant 0 : index
    %c0_3 = arith.constant 0 : index
    %4 = vector.load %arg3[%c0_2, %c0_3] : memref<8x16xi32, #tpu.memory_space<vmem>>, vector<8x16xi32>
    %5 = arith.sitofp %4 : vector<8x16xi32> to vector<8x16xf32>
    %c0_4 = arith.constant 0 : index
    %c0_5 = arith.constant 0 : index
    %6 = vector.load %arg6[%c0_4, %c0_5] : memref<16x128xf32, #tpu.memory_space<vmem>>, vector<16x128xf32>
    %cst = arith.constant dense<0.000000e+00> : vector<8x128xf32>
    %7 = tpu.matmul %5, %6, %cst {dimension_numbers = #tpu.dot_dimension_numbers<[1], [0], [0], [1], [0, 0, 1, 1], [], []>} : vector<8x16xf32>, vector<16x128xf32>, vector<8x128xf32> -> vector<8x128xf32>
    %c1_i32 = arith.constant 1 : i32
    %8 = arith.muli %arg0, %c1_i32 : i32
    %9 = arith.addi %8, %arg1 : i32
    %c8_i32 = arith.constant 8 : i32
    %10 = arith.muli %9, %c8_i32 : i32
    %11 = tpu.iota {dimensions = array<i32: 0>} : vector<8x1xi32>
    %12 = vector.broadcast %10 : i32 to vector<8x1xi32>
    %13 = arith.addi %12, %11 : vector<8x1xi32>
    %c8_i32_6 = arith.constant 8 : i32
    %14 = vector.broadcast %c8_i32_6 : i32 to vector<8x1xi32>
    %15 = arith.cmpi slt, %13, %14 : vector<8x1xi32>
    %c0_7 = arith.constant 0 : index
    %c0_8 = arith.constant 0 : index
    %16 = vector.load %arg4[%c0_7, %c0_8] : memref<1x128xf32, #tpu.memory_space<vmem>>, vector<1x128xf32>
    %17 = vector.broadcast %16 : vector<1x128xf32> to vector<8x128xf32>
    %18 = arith.cmpf oeq, %7, %17 : vector<8x128xf32>
    %19 = vector.broadcast %15 : vector<8x1xi1> to vector<8x128xi1>
    %20 = arith.andi %18, %19 : vector<8x128xi1>
    %c0_9 = arith.constant 0 : index
    %c0_10 = arith.constant 0 : index
    %21 = vector.load %arg5[%c0_9, %c0_10] : memref<1x128xf32, #tpu.memory_space<vmem>>, vector<1x128xf32>
    %cst_11 = arith.constant 0.000000e+00 : f32
    %22 = vector.shape_cast %21 : vector<1x128xf32> to vector<1x128xf32>
    %23 = vector.broadcast %22 : vector<1x128xf32> to vector<8x128xf32>
    %24 = vector.broadcast %cst_11 : f32 to vector<8x128xf32>
    %25 = arith.select %20, %23, %24 : vector<8x128xi1>, vector<8x128xf32>
    %c0_12 = arith.constant 0 : index
    %c0_13 = arith.constant 0 : index
    %26 = vector.load %arg5[%c0_12, %c0_13] : memref<1x128xf32, #tpu.memory_space<vmem>>, vector<1x128xf32>
    %27 = vector.broadcast %26 : vector<1x128xf32> to vector<8x128xf32>
    %28 = arith.mulf %27, %3 : vector<8x128xf32>
    %cst_14 = arith.constant 0.000000e+00 : f32
    %29 = vector.broadcast %cst_14 : f32 to vector<8x128xf32>
    %30 = arith.select %20, %28, %29 : vector<8x128xi1>, vector<8x128xf32>
    %c0_15 = arith.constant 0 : index
    %c0_16 = arith.constant 0 : index
    %31 = vector.load %arg7[%c0_15, %c0_16] : memref<8x128xf32, #tpu.memory_space<vmem>>, vector<8x128xf32>
    %32 = vector.shape_cast %30 : vector<8x128xf32> to vector<1x8x128xf32>
    %cst_17 = arith.constant dense<0.000000e+00> : vector<8x128xf32>
    %33 = vector.multi_reduction <add>, %32, %cst_17 [0] : vector<1x8x128xf32> to vector<8x128xf32>
    %34 = arith.addf %31, %33 : vector<8x128xf32>
    %c0_18 = arith.constant 0 : index
    %c0_19 = arith.constant 0 : index
    %35 = vector.load %arg7[%c0_18, %c0_19] : memref<8x128xf32, #tpu.memory_space<vmem>>, vector<8x128xf32>
    tpu.vector_store %arg7[%c0_18, %c0_19], %34 {strides = array<i32>} : memref<8x128xf32, #tpu.memory_space<vmem>>, vector<8x128xf32>,
    %c0_20 = arith.constant 0 : index
    %c0_21 = arith.constant 0 : index
    %36 = vector.load %arg8[%c0_20, %c0_21] : memref<8x128xf32, #tpu.memory_space<vmem>>, vector<8x128xf32>
    %37 = vector.shape_cast %25 : vector<8x128xf32> to vector<1x8x128xf32>
    %cst_22 = arith.constant dense<0.000000e+00> : vector<8x128xf32>
    %38 = vector.multi_reduction <add>, %37, %cst_22 [0] : vector<1x8x128xf32> to vector<8x128xf32>
    %39 = arith.addf %36, %38 : vector<8x128xf32>
    %c0_23 = arith.constant 0 : index
    %c0_24 = arith.constant 0 : index
    %40 = vector.load %arg8[%c0_23, %c0_24] : memref<8x128xf32, #tpu.memory_space<vmem>>, vector<8x128xf32>
    tpu.vector_store %arg8[%c0_23, %c0_24], %39 {strides = array<i32>} : memref<8x128xf32, #tpu.memory_space<vmem>>, vector<8x128xf32>,
    return
  }
  func.func @transform_0(%arg0: i32, %arg1: i32) -> (i32, i32) {
    %c1_i32 = arith.constant 1 : i32
    %0 = arith.muli %arg0, %c1_i32 : i32
    %1 = arith.addi %0, %arg1 : i32
    %c0_i32 = arith.constant 0 : i32
    %2 = arith.minsi %1, %c0_i32 : i32
    %c0_i32_0 = arith.constant 0 : i32
    %c0_i32_1 = arith.constant 0 : i32
    return %2, %c0_i32_0 : i32, i32
  }
  func.func @transform_1(%arg0: i32, %arg1: i32) -> (i32, i32) {
    %c1_i32 = arith.constant 1 : i32
    %0 = arith.muli %arg0, %c1_i32 : i32
    %1 = arith.addi %0, %arg1 : i32
    %c0_i32 = arith.constant 0 : i32
    %2 = arith.minsi %1, %c0_i32 : i32
    %c0_i32_0 = arith.constant 0 : i32
    %c0_i32_1 = arith.constant 0 : i32
    return %2, %c0_i32_0 : i32, i32
  }
  func.func @transform_2(%arg0: i32, %arg1: i32) -> (i32, i32) {
    %c0_i32 = arith.constant 0 : i32
    %c0_i32_0 = arith.constant 0 : i32
    %c0_i32_1 = arith.constant 0 : i32
    return %c0_i32, %c0_i32_0 : i32, i32
  }
  func.func @transform_3(%arg0: i32, %arg1: i32) -> (i32, i32) {
    %c0_i32 = arith.constant 0 : i32
    %c0_i32_0 = arith.constant 0 : i32
    %c0_i32_1 = arith.constant 0 : i32
    return %c0_i32, %c0_i32_0 : i32, i32
  }
  func.func @transform_4(%arg0: i32, %arg1: i32) -> (i32, i32) {
    %c0_i32 = arith.constant 0 : i32
    %c0_i32_0 = arith.constant 0 : i32
    %c0_i32_1 = arith.constant 0 : i32
    return %c0_i32, %c0_i32_0 : i32, i32
  }
  func.func @transform_5(%arg0: i32, %arg1: i32) -> (i32, i32) {
    %c0_i32 = arith.constant 0 : i32
    %c0_i32_0 = arith.constant 0 : i32
    return %arg0, %c0_i32 : i32, i32
  }
  func.func @transform_6(%arg0: i32, %arg1: i32) -> (i32, i32) {
    %c0_i32 = arith.constant 0 : i32
    %c0_i32_0 = arith.constant 0 : i32
    return %arg0, %c0_i32 : i32, i32
  }
}

</mosaic_0001>

<llo_original>
// kernel: nll_loss_pallas.1
$region0: #{nll_loss_pallas.1}
  #allocation0 [shape = 'u32[]', space=smem, size = 0x4, offset = 0x4, fixed_abs, tag = 'smem constant byte address 0x4 - core index']
  #allocation1 [shape = 'u32[72,128]{1,0:T(1,128)}', space=vmem, size = 0x9000, scoped, tag = 'internal scratch']
  %s0 = inlined_call_operand.vmem [shape: f32[8,128], index: 0, kind: input, shape index: {}]
  %s1 = inlined_call_operand.vmem [shape: s32[8,16], index: 1, kind: input, shape index: {}]
  %s2 = inlined_call_operand.vmem [shape: f32[1,128], index: 2, kind: input, shape index: {}]
  %s3 = inlined_call_operand.vmem [shape: f32[1,128], index: 3, kind: input, shape index: {}]
  %s4 = inlined_call_operand.vmem [shape: f32[16,128], index: 4, kind: input, shape index: {}]
  %s5 = inlined_call_operand.vmem [shape: f32[8,128], index: 5, kind: output, shape index: {0}]
  %s6 = inlined_call_operand.vmem [shape: f32[8,128], index: 6, kind: output, shape index: {1}]
  %7 = xla_tuple %s5, %s6
  %s8 = sld [smem:[#allocation0]]
  $region42: #{nll_loss_pallas.1} parent=0
    _
  %s10 = ssub.s32 1, %s8
  %s11 = scalar_select 0, %s10, %s8
  // Predicated region
  $region2: #{nll_loss_pallas.1} parent=0 // pred_check
    _
  $region3: #{nll_loss_pallas.1} parent=0 // pred_check_branch
    %13 = sbr.rel (0) target = $region5
  $region4: #{nll_loss_pallas.1} parent=0 // pred_region
    %s14 = sadd.s32 0, 0
    %p15 = scmp.lt.s32.totalorder %s14, 0
    %s16 = scalar_select %p15, %s14, 0
    %p17 = scmp.lt.s32.totalorder %s16, 0
    %s18 = scalar_select %p17, %s16, 0
    %s19 = smul.addr %s18, 8
    %s20 = scalar_lea.vmem %s0, %s19
    %s21 = sadd.s32 0, 0
    %p22 = scmp.lt.s32.totalorder %s21, 0
    %s23 = scalar_select %p22, %s21, 0
  $region5: #{nll_loss_pallas.1} parent=0 // pred_fallthru
    _
  // Predicated region
  $region6: #{nll_loss_pallas.1} parent=0 // pred_check
    _
  $region7: #{nll_loss_pallas.1} parent=0 // pred_check_branch
    %25 = sbr.rel (0) target = $region9
  $region8: #{nll_loss_pallas.1} parent=0 // pred_region
    %s26 = sadd.s32 0, 0
    %p27 = scmp.lt.s32.totalorder %s26, 0
    %s28 = scalar_select %p27, %s26, 0
    %p29 = scmp.lt.s32.totalorder %s28, 0
    %s30 = scalar_select %p29, %s28, 0
    %s31 = smul.addr %s30, 8
    %s32 = scalar_lea.vmem %s1, %s31
    %s33 = sadd.s32 0, 0
    %p34 = scmp.lt.s32.totalorder %s33, 0
    %s35 = scalar_select %p34, %s33, 0
  $region9: #{nll_loss_pallas.1} parent=0 // pred_fallthru
    _
  // Predicated region
  $region10: #{nll_loss_pallas.1} parent=0 // pred_check
    _
  $region11: #{nll_loss_pallas.1} parent=0 // pred_check_branch
    %37 = sbr.rel (0) target = $region13
  $region12: #{nll_loss_pallas.1} parent=0 // pred_region
    _
  $region13: #{nll_loss_pallas.1} parent=0 // pred_fallthru
    _
  // Predicated region
  $region14: #{nll_loss_pallas.1} parent=0 // pred_check
    _
  $region15: #{nll_loss_pallas.1} parent=0 // pred_check_branch
    %39 = sbr.rel (0) target = $region17
  $region16: #{nll_loss_pallas.1} parent=0 // pred_region
    _
  $region17: #{nll_loss_pallas.1} parent=0 // pred_fallthru
    _
  // Predicated region
  $region18: #{nll_loss_pallas.1} parent=0 // pred_check
    _
  $region19: #{nll_loss_pallas.1} parent=0 // pred_check_branch
    %41 = sbr.rel (0) target = $region21
  $region20: #{nll_loss_pallas.1} parent=0 // pred_region
    _
  $region21: #{nll_loss_pallas.1} parent=0 // pred_fallthru
    _
  %s42 = sadd.s32 0, 0
  %p43 = scmp.lt.s32.totalorder %s42, 0
  %s44 = scalar_select %p43, %s42, 0
  %p45 = scmp.lt.s32.totalorder %s44, 0
  %s46 = scalar_select %p45, %s44, 0
  %s47 = smul.addr %s46, 8
  %s48 = scalar_lea.vmem %s0, %s47
  %s49 = sadd.s32 0, 0
  %p50 = scmp.lt.s32.totalorder %s49, 0
  %s51 = scalar_select %p50, %s49, 0
  %p52 = scmp.lt.s32.totalorder %s51, 0
  %s53 = scalar_select %p52, %s51, 0
  %s54 = smul.addr %s53, 8
  %s55 = scalar_lea.vmem %s1, %s54
  %s56 = sadd.s32 0, 0
  %p57 = scmp.lt.s32.totalorder %s56, 0
  %s58 = scalar_select %p57, %s56, 0
  %p59 = scmp.lt.s32.totalorder %s58, 0
  %s60 = scalar_select %p59, %s58, 0
  %s61 = smul.addr %s60, 8
  %s62 = scalar_lea.vmem %s0, %s61
  %s63 = sadd.s32 0, 0
  %p64 = scmp.lt.s32.totalorder %s63, 0
  %s65 = scalar_select %p64, %s63, 0
  %s66 = sadd.s32 0, 0
  %p67 = scmp.lt.s32.totalorder %s66, 0
  %s68 = scalar_select %p67, %s66, 0
  %p69 = scmp.lt.s32.totalorder %s68, 0
  %s70 = scalar_select %p69, %s68, 0
  %s71 = smul.addr %s70, 8
  %s72 = scalar_lea.vmem %s1, %s71
  %s73 = sadd.s32 0, 0
  %p74 = scmp.lt.s32.totalorder %s73, 0
  %s75 = scalar_select %p74, %s73, 0
  %p76 = scmp.eq.s32.totalorder 0, 0
  // Predicated region
  $region22: #{nll_loss_pallas.1} parent=0 // pred_check
    %p77 = pneg %p76
  $region23: #{nll_loss_pallas.1} parent=0 // pred_check_branch
    %79 = sbr.rel (%p77) target = $region25
  $region24: #{nll_loss_pallas.1} parent=0 // pred_region
    %80 = vst [vmem:[%s5] sm:$0xff] 0.0
    %81 = vst [vmem:[%s6] sm:$0xff] 0.0
  $region25: #{nll_loss_pallas.1} parent=0 // pred_fallthru
    _
  %v82 = vld [vmem:[%s62] sm:$0xff]
  %v83 = vld [vmem:[%s72] sm:$0xff]
  %v84 = vcvt.s32.f32 %v83
  %v85 = vld [vmem:[%s4] sm:$0xff]
  %v86 = vld [vmem:[%s4 + $0x8] sm:$0xff]
  %vm87 = vcmask 130048
  %v89 = vsel %vm87, %v84, 0
  %91 = vmatpush.msra.mxu0 0.0
  %92 = vmatpush.msra.mxu0 0.0
  %93 = vmatpush.msra.mxu0 0.0
  %94 = vmatpush.msra.mxu0 0.0
  %95 = vmatpush.msra.mxu0 0.0
  %96 = vmatpush.msra.mxu0 0.0
  %97 = vmatpush.msra.mxu0 0.0
  %98 = vmatpush.msra.mxu0 0.0
  %99 = vmatpush.msra.mxu0 0.0
  %100 = vmatpush.msra.mxu0 0.0
  %101 = vmatpush.msra.mxu0 0.0
  %102 = vmatpush.msra.mxu0 0.0
  %103 = vmatpush.msra.mxu0 0.0
  %104 = vmatpush.msra.mxu0 0.0
  %105 = vmatpush.msra.mxu0 %v86
  %106 = vmatpush.msra.mxu0 %v85
  %107 = vmatmul.f32.gmra.mxu0 %v89
  %v108 = vpop.f32.mrf.mxu0
  %v109 = vadd.f32 0.0, %v108
  %110 = vdwg.mxu0
  %s111 = sadd.s32 0, 0
  %s112 = smul.u32 %s111, 8
  %v113 = vlaneseq
  %v114 = vshrl.u32 %v113, 7
  %v115 = vstv %s112
  %v116 = vadd.s32 %v115, %v114
  %vm117 = vcmp.lt.s32.totalorder %v116, 8
  %v118 = vld [vmem:[%s2] sm:$0x1]
  %v120 = vperm.slane %v118, 0
  %vm122 = vcmp.eq.f32.partialorder %v109, %v120
  %v123 = vsel %vm117, 1, 0
  %vm124 = vcmp.eq.s32.totalorder %v123, 1
  %vm125 = vmand %vm122, %vm124
  %v126 = vld [vmem:[%s3] sm:$0x1]
  %v128 = vperm.slane %v126, 0
  %v130 = vsel %vm125, %v128, 0.0
  %v131 = vmul.f32 %v128, %v82
  %v132 = vsel %vm125, %v131, 0.0
  %v133 = vld [vmem:[%s5] sm:$0xff]
  %v134 = vadd.f32 %v132, 0.0
  %v135 = vadd.f32 %v133, %v134
  %136 = vst [vmem:[%s5] sm:$0xff] %v135
  %v137 = vld [vmem:[%s6] sm:$0xff]
  %v138 = vadd.f32 %v130, 0.0
  %v139 = vadd.f32 %v137, %v138
  %140 = vst [vmem:[%s6] sm:$0xff] %v139
  // Predicated region
  $region26: #{nll_loss_pallas.1} parent=0 // pred_check
    _
  $region27: #{nll_loss_pallas.1} parent=0 // pred_check_branch
    %142 = sbr.rel (0) target = $region29
  $region28: #{nll_loss_pallas.1} parent=0 // pred_region
    _
  $region29: #{nll_loss_pallas.1} parent=0 // pred_fallthru
    _
  // Predicated region
  $region30: #{nll_loss_pallas.1} parent=0 // pred_check
    _
  $region31: #{nll_loss_pallas.1} parent=0 // pred_check_branch
    %144 = sbr.rel (0) target = $region33
  $region32: #{nll_loss_pallas.1} parent=0 // pred_region
    _
  $region33: #{nll_loss_pallas.1} parent=0 // pred_fallthru
    _
  // Predicated region
  $region34: #{nll_loss_pallas.1} parent=0 // pred_check
    _
  $region35: #{nll_loss_pallas.1} parent=0 // pred_check_branch
    %146 = sbr.rel (0) target = $region37
  $region36: #{nll_loss_pallas.1} parent=0 // pred_region
    _
  $region37: #{nll_loss_pallas.1} parent=0 // pred_fallthru
    _
  // Predicated region
  $region38: #{nll_loss_pallas.1} parent=0 // pred_check
    _
  $region39: #{nll_loss_pallas.1} parent=0 // pred_check_branch
    %148 = sbr.rel (0) target = $region41
  $region40: #{nll_loss_pallas.1} parent=0 // pred_region
    _
  $region41: #{nll_loss_pallas.1} parent=0 // pred_fallthru
    _

</llo_original>
